<compile_context>
chip_gen: v7x
topology: tpu7x:2x2x1
jax: 0.10.0
libtpu: 0.0.40
codegen_flags: <defaults>
</compile_context>

<pallas_src>
import functools

import jax
import jax.numpy as jnp
from jax import lax
from jax.experimental import pallas as pl
from jax.experimental.pallas import tpu as pltpu

_EPS = 1e-8            # ATen cosine_similarity eps
_EPS_SQ = _EPS * _EPS


def _contrastive_loss_kernel(x1_ref, x2_ref, temp_ref, out_ref,
                             acc_ref, x1n_ref, x2n_ref, *, s_total):
    """Grid = (row_blocks [parallel], seq_tiles [arbitrary, reduction])."""
    # Hoist all grid queries to the top level (never inside pl.when bodies).
    i = pl.program_id(0)
    k = pl.program_id(1)
    nk = pl.num_programs(1)
    tb, b = acc_ref.shape
    ts = x1_ref.shape[1]

    @pl.when(k == 0)
    def _init():
        acc_ref[...] = jnp.zeros_like(acc_ref)

    # ---- whole-tile L2 normalization: one vectorized VPU pass + EUP rsqrt ----
    a1 = x1_ref[...].astype(jnp.float32)                       # (B,  ts, D)
    a2 = x2_ref[...].astype(jnp.float32)                       # (tB, ts, D)
    n1 = jnp.sum(a1 * a1, axis=-1, keepdims=True)              # (B,  ts, 1)
    n2 = jnp.sum(a2 * a2, axis=-1, keepdims=True)              # (tB, ts, 1)
    x1n_ref[...] = (a1 * lax.rsqrt(jnp.maximum(n1, _EPS_SQ))).astype(x1n_ref.dtype)
    x2n_ref[...] = (a2 * lax.rsqrt(jnp.maximum(n2, _EPS_SQ))).astype(x2n_ref.dtype)

    # ---- acc[i, j] += sum_s <x2n[i,s,:], x1n[j,s,:]> --------------------------
    # bf16 operands into the MXU, f32 accumulation carried in vregs; acc_ref is
    # read/modified/written exactly once per grid step.
    def _body(s, acc):
        return acc + lax.dot_general(
            x2n_ref[:, s, :], x1n_ref[:, s, :],
            (((1,), (1,)), ((), ())), preferred_element_type=jnp.float32)

    acc = lax.fori_loop(0, ts, _body, jnp.zeros((tb, b), jnp.float32),
                        unroll=min(ts, 8))
    acc_ref[...] += acc

    @pl.when(k == nk - 1)
    def _epilogue():
        # logits[i, j] = (sum_s cos) / (S * temp); one scalar reciprocal total.
        scale = 1.0 / (temp_ref[0] * jnp.float32(s_total))
        logits = acc_ref[...] * scale                           # (tB, B)
        m = jnp.max(logits, axis=-1, keepdims=True)
        lse = jnp.log(jnp.sum(jnp.exp(logits - m), axis=-1, keepdims=True)) + m
        row = lax.broadcasted_iota(jnp.int32, (tb, b), 0) + i * tb
        col = lax.broadcasted_iota(jnp.int32, (tb, b), 1)
        diag = jnp.sum(jnp.where(row == col, logits, 0.0), axis=-1,
                       keepdims=True)
        out_ref[...] = lse - diag          # per-row cross-entropy terms (tB, 1)


def _vmem_capacity_bytes():
    try:
        return int(pltpu.get_tpu_info().vmem_capacity_bytes)
    except Exception:
        return 64 * 1024 * 1024            # conservative (v7x-sized) fallback


def _pick_seq_tile(b, tb, s, d, in_itemsize, budget_bytes):
    """Largest legal S-tile (multiple of 8 dividing S, or S itself) whose
    double-buffered input blocks + bf16 normalized scratch fit the budget."""
    bytes_per_s = (b + tb) * d * (2 * in_itemsize + 2)
    if bytes_per_s * s <= budget_bytes:
        return s
    cands = [t for t in range(8, s, 8)
             if s % t == 0 and bytes_per_s * t <= budget_bytes]
    if cands:
        return max(cands)
    return 8 if s % 8 == 0 else s          # fallback; limit derived from it below


def contrastive_loss(x1, x2, temp, *, row_block=None, vmem_budget_bytes=None):
    """ContrastiveLoss.forward(x1, x2) with parameter `temp` of shape (1,)."""
    assert x1.shape == x2.shape
    b, s, d = x1.shape
    temp = jnp.asarray(temp, jnp.float32).reshape(1)

    tb = b if row_block is None else int(row_block)
    assert b % tb == 0 and (tb == b or tb % 8 == 0), (
        "row_block must divide B and be a multiple of 8 (or equal B)")

    cap = _vmem_capacity_bytes()
    budget = (3 * cap) // 8 if vmem_budget_bytes is None else int(vmem_budget_bytes)
    in_itemsize = x1.dtype.itemsize        # keep inputs in storage dtype for DMA
    ts = _pick_seq_tile(b, tb, s, d, in_itemsize, budget)
    assert s % ts == 0

    # VMEM limit derived from the actual chosen tile (+ scratch + slack).
    needed = (2 * (b + tb) * ts * d * in_itemsize   # double-buffered input blocks
              + (b + tb) * ts * d * 2               # normalized bf16 scratch
              + tb * b * 4 + 2 * tb * 4             # accumulator + output blocks
              + (2 << 20))                          # compiler internal slack
    vmem_limit = max(needed + max(needed // 4, 4 << 20), 16 << 20)
    vmem_limit = min(vmem_limit, (7 * cap) // 8)
    vmem_limit = max(vmem_limit, needed)

    grid = (b // tb, s // ts)
    kernel = functools.partial(_contrastive_loss_kernel, s_total=s)

    per_row = pl.pallas_call(
        kernel,
        out_shape=jax.ShapeDtypeStruct((b, 1), jnp.float32),
        grid=grid,
        in_specs=[
            pl.BlockSpec((b, ts, d), lambda i, k: (0, k, 0)),     # x1: all rows
            pl.BlockSpec((tb, ts, d), lambda i, k: (i, k, 0)),    # x2: row block
            pl.BlockSpec(memory_space=pltpu.MemorySpace.SMEM),    # temp (scalar)
        ],
        out_specs=pl.BlockSpec((tb, 1), lambda i, k: (i, 0)),
        scratch_shapes=[
            pltpu.VMEM((tb, b), jnp.float32),          # sum_s cos accumulator
            pltpu.VMEM((b, ts, d), jnp.bfloat16),      # normalized x1 tile
            pltpu.VMEM((tb, ts, d), jnp.bfloat16),     # normalized x2 tile
        ],
        compiler_params=pltpu.CompilerParams(
            dimension_semantics=("parallel", "arbitrary"),
            vmem_limit_bytes=int(vmem_limit)),
    )(x1, x2, temp)

    return jnp.mean(per_row)


def _contrastive_loss_ref(x1, x2, temp):
    """Pure-JAX reference mirroring the PyTorch code (ATen-exact clamp)."""
    w12 = jnp.sum(x2[:, None, :, :] * x1[None, :, :, :], axis=-1)
    w1 = jnp.sum(x1 * x1, axis=-1)
    w2 = jnp.sum(x2 * x2, axis=-1)
    cos = w12 / jnp.sqrt(jnp.maximum(w2[:, None, :] * w1[None, :, :], _EPS_SQ))
    sim = jnp.mean(cos, axis=-1)
    logits = sim / temp[0]
    n = sim.shape[0]
    lse = jax.scipy.special.logsumexp(logits, axis=-1)
    return jnp.mean(lse - logits[jnp.arange(n), jnp.arange(n)])


if __name__ == "__main__":
    key = jax.random.PRNGKey(0)
    temp = jnp.ones((1,), dtype=jnp.float32)              # ContrastiveLoss.temp

    # 1) Small shapes consistent with encoder_last_hidden_state (B, S, D).
    B, S, D = 4, 8, 32
    k1, k2, k3, k4, k5, k6 = jax.random.split(key, 6)
    x1 = jax.random.normal(k1, (B, S, D), dtype=jnp.float32)
    x2 = jax.random.normal(k2, (B, S, D), dtype=jnp.float32)
    loss = contrastive_loss(x1, x2, temp)
    jax.block_until_ready(loss)
    ref = _contrastive_loss_ref(x1, x2, temp)
    assert jnp.allclose(loss, ref, rtol=2e-2, atol=2e-2), (loss, ref)

    # 2) Multi-tile sequence reduction (forces ts=8, 4 grid steps over S).
    x1b = jax.random.normal(k3, (4, 32, 32), dtype=jnp.float32)
    x2b = jax.random.normal(k4, (4, 32, 32), dtype=jnp.float32)
    loss_b = contrastive_loss(x1b, x2b, temp, vmem_budget_bytes=32 * 1024)
    jax.block_until_ready(loss_b)
    ref_b = _contrastive_loss_ref(x1b, x2b, temp)
    assert jnp.allclose(loss_b, ref_b, rtol=2e-2, atol=2e-2), (loss_b, ref_b)

    # 3) Row-blocked path (the leading "parallel" axis used on v7x).
    x1c = jax.random.normal(k5, (16, 8, 32), dtype=jnp.float32)
    x2c = jax.random.normal(k6, (16, 8, 32), dtype=jnp.float32)
    loss_c = contrastive_loss(x1c, x2c, temp, row_block=8)
    jax.block_until_ready(loss_c)
    ref_c = _contrastive_loss_ref(x1c, x2c, temp)
    assert jnp.allclose(loss_c, ref_c, rtol=2e-2, atol=2e-2), (loss_c, ref_c)

    print("KERNEL_OK")
</pallas_src>

<mosaic_0001>
module attributes {stable_mosaic.version = 11 : i64} {
  func.func @_contrastive_loss_kernel(%arg0: i32, %arg1: i32, %arg2: memref<4x8x32xf32, #tpu.memory_space<vmem>>, %arg3: memref<4x8x32xf32, #tpu.memory_space<vmem>>, %arg4: memref<1xf32, #tpu.memory_space<smem>>, %arg5: memref<4x1xf32, #tpu.memory_space<vmem>>, %arg6: memref<4x4xf32, #tpu.memory_space<vmem>>, %arg7: memref<4x8x32xbf16, #tpu.memory_space<vmem>>, %arg8: memref<4x8x32xbf16, #tpu.memory_space<vmem>>) attributes {dimension_semantics = [#tpu.dimension_semantics<parallel>, #tpu.dimension_semantics<arbitrary>], iteration_bounds = array<i64: 1, 1>, scalar_prefetch = 0 : i64, scratch_operands = 3 : i64, tpu.core_type = #tpu.core_type<tc>, window_params = [{transform_indices = @transform_0, window_bounds = array<i64: 4, 8, 32>}, {transform_indices = @transform_1, window_bounds = array<i64: 4, 8, 32>}, {transform_indices = @transform_2, window_bounds = array<i64: 1>}, {transform_indices = @transform_3, window_bounds = array<i64: 4, 1>}]} {
    %c0_i32 = arith.constant 0 : i32
    %0 = arith.cmpi eq, %arg1, %c0_i32 : i32
    %1 = arith.extui %0 : i1 to i32
    %c0_i32_0 = arith.constant 0 : i32
    %2 = arith.cmpi ne, %1, %c0_i32_0 : i32
    scf.if %2 {
      %cst_63 = arith.constant 0.000000e+00 : f32
      %96 = vector.broadcast %cst_63 : f32 to vector<4x4xf32>
      %c0_64 = arith.constant 0 : index
      %c0_65 = arith.constant 0 : index
      %97 = vector.load %arg6[%c0_64, %c0_65] : memref<4x4xf32, #tpu.memory_space<vmem>>, vector<4x4xf32>
      tpu.vector_store %arg6[%c0_64, %c0_65], %96 {strides = array<i32>} : memref<4x4xf32, #tpu.memory_space<vmem>>, vector<4x4xf32>,
    } else {
    }
    %c0 = arith.constant 0 : index
    %c0_1 = arith.constant 0 : index
    %c0_2 = arith.constant 0 : index
    %3 = vector.load %arg2[%c0, %c0_1, %c0_2] : memref<4x8x32xf32, #tpu.memory_space<vmem>>, vector<4x8x32xf32>
    %c0_3 = arith.constant 0 : index
    %c0_4 = arith.constant 0 : index
    %c0_5 = arith.constant 0 : index
    %4 = vector.load %arg3[%c0_3, %c0_4, %c0_5] : memref<4x8x32xf32, #tpu.memory_space<vmem>>, vector<4x8x32xf32>
    %5 = arith.mulf %3, %3 : vector<4x8x32xf32>
    %cst = arith.constant dense<0.000000e+00> : vector<4x8xf32>
    %6 = vector.multi_reduction <add>, %5, %cst [2] : vector<4x8x32xf32> to vector<4x8xf32>
    %7 = vector.shape_cast %6 : vector<4x8xf32> to vector<4x8x1xf32>
    %8 = arith.mulf %4, %4 : vector<4x8x32xf32>
    %cst_6 = arith.constant dense<0.000000e+00> : vector<4x8xf32>
    %9 = vector.multi_reduction <add>, %8, %cst_6 [2] : vector<4x8x32xf32> to vector<4x8xf32>
    %10 = vector.shape_cast %9 : vector<4x8xf32> to vector<4x8x1xf32>
    %cst_7 = arith.constant 1.000000e-16 : f32
    %11 = vector.broadcast %cst_7 : f32 to vector<4x8x1xf32>
    %12 = arith.maximumf %7, %11 : vector<4x8x1xf32>
    %13 = math.rsqrt %12 : vector<4x8x1xf32>
    %14 = vector.broadcast %13 : vector<4x8x1xf32> to vector<4x8x32xf32>
    %15 = arith.mulf %3, %14 : vector<4x8x32xf32>
    %16 = arith.truncf %15 : vector<4x8x32xf32> to vector<4x8x32xbf16>
    %c0_8 = arith.constant 0 : index
    %c0_9 = arith.constant 0 : index
    %c0_10 = arith.constant 0 : index
    %17 = vector.load %arg7[%c0_8, %c0_9, %c0_10] : memref<4x8x32xbf16, #tpu.memory_space<vmem>>, vector<4x8x32xbf16>
    tpu.vector_store %arg7[%c0_8, %c0_9, %c0_10], %16 {strides = array<i32>} : memref<4x8x32xbf16, #tpu.memory_space<vmem>>, vector<4x8x32xbf16>,
    %cst_11 = arith.constant 1.000000e-16 : f32
    %18 = vector.broadcast %cst_11 : f32 to vector<4x8x1xf32>
    %19 = arith.maximumf %10, %18 : vector<4x8x1xf32>
    %20 = math.rsqrt %19 : vector<4x8x1xf32>
    %21 = vector.broadcast %20 : vector<4x8x1xf32> to vector<4x8x32xf32>
    %22 = arith.mulf %4, %21 : vector<4x8x32xf32>
    %23 = arith.truncf %22 : vector<4x8x32xf32> to vector<4x8x32xbf16>
    %c0_12 = arith.constant 0 : index
    %c0_13 = arith.constant 0 : index
    %c0_14 = arith.constant 0 : index
    %24 = vector.load %arg8[%c0_12, %c0_13, %c0_14] : memref<4x8x32xbf16, #tpu.memory_space<vmem>>, vector<4x8x32xbf16>
    tpu.vector_store %arg8[%c0_12, %c0_13, %c0_14], %23 {strides = array<i32>} : memref<4x8x32xbf16, #tpu.memory_space<vmem>>, vector<4x8x32xbf16>,
    %cst_15 = arith.constant 0.000000e+00 : f32
    %25 = vector.broadcast %cst_15 : f32 to vector<4x4xf32>
    %c0_i32_16 = arith.constant 0 : i32
    %c0_17 = arith.constant 0 : index
    %26 = arith.index_cast %c0_i32_16 : i32 to index
    %c0_18 = arith.constant 0 : index
    %27 = vector.load %arg8[%c0_17, %26, %c0_18] : memref<4x8x32xbf16, #tpu.memory_space<vmem>>, vector<4x1x32xbf16>
    %28 = vector.shape_cast %27 : vector<4x1x32xbf16> to vector<4x32xbf16>
    %c0_19 = arith.constant 0 : index
    %29 = arith.index_cast %c0_i32_16 : i32 to index
    %c0_20 = arith.constant 0 : index
    %30 = vector.load %arg7[%c0_19, %29, %c0_20] : memref<4x8x32xbf16, #tpu.memory_space<vmem>>, vector<4x1x32xbf16>
    %31 = vector.shape_cast %30 : vector<4x1x32xbf16> to vector<4x32xbf16>
    %cst_21 = arith.constant dense<0.000000e+00> : vector<4x4xf32>
    %32 = tpu.matmul %28, %31, %cst_21 {dimension_numbers = #tpu.dot_dimension_numbers<[1], [1], [0], [0], [0, 0, 1, 0], [], []>} : vector<4x32xbf16>, vector<4x32xbf16>, vector<4x4xf32> -> vector<4x4xf32>
    %33 = arith.addf %25, %32 : vector<4x4xf32>
    %c1_i32 = arith.constant 1 : i32
    %c0_22 = arith.constant 0 : index
    %34 = arith.index_cast %c1_i32 : i32 to index
    %c0_23 = arith.constant 0 : index
    %35 = vector.load %arg8[%c0_22, %34, %c0_23] : memref<4x8x32xbf16, #tpu.memory_space<vmem>>, vector<4x1x32xbf16>
    %36 = vector.shape_cast %35 : vector<4x1x32xbf16> to vector<4x32xbf16>
    %c0_24 = arith.constant 0 : index
    %37 = arith.index_cast %c1_i32 : i32 to index
    %c0_25 = arith.constant 0 : index
    %38 = vector.load %arg7[%c0_24, %37, %c0_25] : memref<4x8x32xbf16, #tpu.memory_space<vmem>>, vector<4x1x32xbf16>
    %39 = vector.shape_cast %38 : vector<4x1x32xbf16> to vector<4x32xbf16>
    %cst_26 = arith.constant dense<0.000000e+00> : vector<4x4xf32>
    %40 = tpu.matmul %36, %39, %cst_26 {dimension_numbers = #tpu.dot_dimension_numbers<[1], [1], [0], [0], [0, 0, 1, 0], [], []>} : vector<4x32xbf16>, vector<4x32xbf16>, vector<4x4xf32> -> vector<4x4xf32>
    %41 = arith.addf %33, %40 : vector<4x4xf32>
    %c2_i32 = arith.constant 2 : i32
    %c0_27 = arith.constant 0 : index
    %42 = arith.index_cast %c2_i32 : i32 to index
    %c0_28 = arith.constant 0 : index
    %43 = vector.load %arg8[%c0_27, %42, %c0_28] : memref<4x8x32xbf16, #tpu.memory_space<vmem>>, vector<4x1x32xbf16>
    %44 = vector.shape_cast %43 : vector<4x1x32xbf16> to vector<4x32xbf16>
    %c0_29 = arith.constant 0 : index
    %45 = arith.index_cast %c2_i32 : i32 to index
    %c0_30 = arith.constant 0 : index
    %46 = vector.load %arg7[%c0_29, %45, %c0_30] : memref<4x8x32xbf16, #tpu.memory_space<vmem>>, vector<4x1x32xbf16>
    %47 = vector.shape_cast %46 : vector<4x1x32xbf16> to vector<4x32xbf16>
    %cst_31 = arith.constant dense<0.000000e+00> : vector<4x4xf32>
    %48 = tpu.matmul %44, %47, %cst_31 {dimension_numbers = #tpu.dot_dimension_numbers<[1], [1], [0], [0], [0, 0, 1, 0], [], []>} : vector<4x32xbf16>, vector<4x32xbf16>, vector<4x4xf32> -> vector<4x4xf32>
    %49 = arith.addf %41, %48 : vector<4x4xf32>
    %c3_i32 = arith.constant 3 : i32
    %c0_32 = arith.constant 0 : index
    %50 = arith.index_cast %c3_i32 : i32 to index
    %c0_33 = arith.constant 0 : index
    %51 = vector.load %arg8[%c0_32, %50, %c0_33] : memref<4x8x32xbf16, #tpu.memory_space<vmem>>, vector<4x1x32xbf16>
    %52 = vector.shape_cast %51 : vector<4x1x32xbf16> to vector<4x32xbf16>
    %c0_34 = arith.constant 0 : index
    %53 = arith.index_cast %c3_i32 : i32 to index
    %c0_35 = arith.constant 0 : index
    %54 = vector.load %arg7[%c0_34, %53, %c0_35] : memref<4x8x32xbf16, #tpu.memory_space<vmem>>, vector<4x1x32xbf16>
    %55 = vector.shape_cast %54 : vector<4x1x32xbf16> to vector<4x32xbf16>
    %cst_36 = arith.constant dense<0.000000e+00> : vector<4x4xf32>
    %56 = tpu.matmul %52, %55, %cst_36 {dimension_numbers = #tpu.dot_dimension_numbers<[1], [1], [0], [0], [0, 0, 1, 0], [], []>} : vector<4x32xbf16>, vector<4x32xbf16>, vector<4x4xf32> -> vector<4x4xf32>
    %57 = arith.addf %49, %56 : vector<4x4xf32>
    %c4_i32 = arith.constant 4 : i32
    %c0_37 = arith.constant 0 : index
    %58 = arith.index_cast %c4_i32 : i32 to index
    %c0_38 = arith.constant 0 : index
    %59 = vector.load %arg8[%c0_37, %58, %c0_38] : memref<4x8x32xbf16, #tpu.memory_space<vmem>>, vector<4x1x32xbf16>
    %60 = vector.shape_cast %59 : vector<4x1x32xbf16> to vector<4x32xbf16>
    %c0_39 = arith.constant 0 : index
    %61 = arith.index_cast %c4_i32 : i32 to index
    %c0_40 = arith.constant 0 : index
    %62 = vector.load %arg7[%c0_39, %61, %c0_40] : memref<4x8x32xbf16, #tpu.memory_space<vmem>>, vector<4x1x32xbf16>
    %63 = vector.shape_cast %62 : vector<4x1x32xbf16> to vector<4x32xbf16>
    %cst_41 = arith.constant dense<0.000000e+00> : vector<4x4xf32>
    %64 = tpu.matmul %60, %63, %cst_41 {dimension_numbers = #tpu.dot_dimension_numbers<[1], [1], [0], [0], [0, 0, 1, 0], [], []>} : vector<4x32xbf16>, vector<4x32xbf16>, vector<4x4xf32> -> vector<4x4xf32>
    %65 = arith.addf %57, %64 : vector<4x4xf32>
    %c5_i32 = arith.constant 5 : i32
    %c0_42 = arith.constant 0 : index
    %66 = arith.index_cast %c5_i32 : i32 to index
    %c0_43 = arith.constant 0 : index
    %67 = vector.load %arg8[%c0_42, %66, %c0_43] : memref<4x8x32xbf16, #tpu.memory_space<vmem>>, vector<4x1x32xbf16>
    %68 = vector.shape_cast %67 : vector<4x1x32xbf16> to vector<4x32xbf16>
    %c0_44 = arith.constant 0 : index
    %69 = arith.index_cast %c5_i32 : i32 to index
    %c0_45 = arith.constant 0 : index
    %70 = vector.load %arg7[%c0_44, %69, %c0_45] : memref<4x8x32xbf16, #tpu.memory_space<vmem>>, vector<4x1x32xbf16>
    %71 = vector.shape_cast %70 : vector<4x1x32xbf16> to vector<4x32xbf16>
    %cst_46 = arith.constant dense<0.000000e+00> : vector<4x4xf32>
    %72 = tpu.matmul %68, %71, %cst_46 {dimension_numbers = #tpu.dot_dimension_numbers<[1], [1], [0], [0], [0, 0, 1, 0], [], []>} : vector<4x32xbf16>, vector<4x32xbf16>, vector<4x4xf32> -> vector<4x4xf32>
    %73 = arith.addf %65, %72 : vector<4x4xf32>
    %c6_i32 = arith.constant 6 : i32
    %c0_47 = arith.constant 0 : index
    %74 = arith.index_cast %c6_i32 : i32 to index
    %c0_48 = arith.constant 0 : index
    %75 = vector.load %arg8[%c0_47, %74, %c0_48] : memref<4x8x32xbf16, #tpu.memory_space<vmem>>, vector<4x1x32xbf16>
    %76 = vector.shape_cast %75 : vector<4x1x32xbf16> to vector<4x32xbf16>
    %c0_49 = arith.constant 0 : index
    %77 = arith.index_cast %c6_i32 : i32 to index
    %c0_50 = arith.constant 0 : index
    %78 = vector.load %arg7[%c0_49, %77, %c0_50] : memref<4x8x32xbf16, #tpu.memory_space<vmem>>, vector<4x1x32xbf16>
    %79 = vector.shape_cast %78 : vector<4x1x32xbf16> to vector<4x32xbf16>
    %cst_51 = arith.constant dense<0.000000e+00> : vector<4x4xf32>
    %80 = tpu.matmul %76, %79, %cst_51 {dimension_numbers = #tpu.dot_dimension_numbers<[1], [1], [0], [0], [0, 0, 1, 0], [], []>} : vector<4x32xbf16>, vector<4x32xbf16>, vector<4x4xf32> -> vector<4x4xf32>
    %81 = arith.addf %73, %80 : vector<4x4xf32>
    %c7_i32 = arith.constant 7 : i32
    %c0_52 = arith.constant 0 : index
    %82 = arith.index_cast %c7_i32 : i32 to index
    %c0_53 = arith.constant 0 : index
    %83 = vector.load %arg8[%c0_52, %82, %c0_53] : memref<4x8x32xbf16, #tpu.memory_space<vmem>>, vector<4x1x32xbf16>
    %84 = vector.shape_cast %83 : vector<4x1x32xbf16> to vector<4x32xbf16>
    %c0_54 = arith.constant 0 : index
    %85 = arith.index_cast %c7_i32 : i32 to index
    %c0_55 = arith.constant 0 : index
    %86 = vector.load %arg7[%c0_54, %85, %c0_55] : memref<4x8x32xbf16, #tpu.memory_space<vmem>>, vector<4x1x32xbf16>
    %87 = vector.shape_cast %86 : vector<4x1x32xbf16> to vector<4x32xbf16>
    %cst_56 = arith.constant dense<0.000000e+00> : vector<4x4xf32>
    %88 = tpu.matmul %84, %87, %cst_56 {dimension_numbers = #tpu.dot_dimension_numbers<[1], [1], [0], [0], [0, 0, 1, 0], [], []>} : vector<4x32xbf16>, vector<4x32xbf16>, vector<4x4xf32> -> vector<4x4xf32>
    %89 = arith.addf %81, %88 : vector<4x4xf32>
    %c8_i32 = arith.constant 8 : i32
    %c0_57 = arith.constant 0 : index
    %c0_58 = arith.constant 0 : index
    %90 = vector.load %arg6[%c0_57, %c0_58] : memref<4x4xf32, #tpu.memory_space<vmem>>, vector<4x4xf32>
    %91 = arith.addf %90, %89 : vector<4x4xf32>
    %c0_59 = arith.constant 0 : index
    %c0_60 = arith.constant 0 : index
    %92 = vector.load %arg6[%c0_59, %c0_60] : memref<4x4xf32, #tpu.memory_space<vmem>>, vector<4x4xf32>
    tpu.vector_store %arg6[%c0_59, %c0_60], %91 {strides = array<i32>} : memref<4x4xf32, #tpu.memory_space<vmem>>, vector<4x4xf32>,
    %c0_i32_61 = arith.constant 0 : i32
    %93 = arith.cmpi eq, %arg1, %c0_i32_61 : i32
    %94 = arith.extui %93 : i1 to i32
    %c0_i32_62 = arith.constant 0 : i32
    %95 = arith.cmpi ne, %94, %c0_i32_62 : i32
    scf.if %95 {
      %c0_63 = arith.constant 0 : index
      %96 = memref.load %arg4[%c0_63] : memref<1xf32, #tpu.memory_space<smem>>
      %cst_64 = arith.constant 8.000000e+00 : f32
      %97 = arith.mulf %96, %cst_64 : f32
      %cst_65 = arith.constant 1.000000e+00 : f32
      %98 = arith.divf %cst_65, %97 : f32
      %c0_66 = arith.constant 0 : index
      %c0_67 = arith.constant 0 : index
      %99 = vector.load %arg6[%c0_66, %c0_67] : memref<4x4xf32, #tpu.memory_space<vmem>>, vector<4x4xf32>
      %100 = vector.broadcast %98 : f32 to vector<4x4xf32>
      %101 = arith.mulf %99, %100 : vector<4x4xf32>
      %cst_68 = arith.constant dense<0xFF800000> : vector<4xf32>
      %102 = vector.multi_reduction <maximumf>, %101, %cst_68 [1] : vector<4x4xf32> to vector<4xf32>
      %103 = vector.shape_cast %102 : vector<4xf32> to vector<4x1xf32>
      %104 = vector.broadcast %103 : vector<4x1xf32> to vector<4x4xf32>
      %105 = arith.subf %101, %104 : vector<4x4xf32>
      %106 = math.exp %105 : vector<4x4xf32>
      %cst_69 = arith.constant dense<0.000000e+00> : vector<4xf32>
      %107 = vector.multi_reduction <add>, %106, %cst_69 [1] : vector<4x4xf32> to vector<4xf32>
      %108 = vector.shape_cast %107 : vector<4xf32> to vector<4x1xf32>
      %109 = math.log %108 : vector<4x1xf32>
      %110 = arith.addf %109, %103 : vector<4x1xf32>
      %111 = tpu.iota {dimensions = array<i32: 0>} : vector<4x4xi32>
      %c4_i32_70 = arith.constant 4 : i32
      %112 = arith.muli %arg0, %c4_i32_70 : i32
      %113 = vector.broadcast %112 : i32 to vector<4x4xi32>
      %114 = arith.addi %111, %113 : vector<4x4xi32>
      %115 = tpu.iota {dimensions = array<i32: 1>} : vector<4x4xi32>
      %116 = arith.cmpi eq, %114, %115 : vector<4x4xi32>
      %cst_71 = arith.constant 0.000000e+00 : f32
      %117 = vector.broadcast %cst_71 : f32 to vector<4x4xf32>
      %118 = arith.select %116, %101, %117 : vector<4x4xi1>, vector<4x4xf32>
      %cst_72 = arith.constant dense<0.000000e+00> : vector<4xf32>
      %119 = vector.multi_reduction <add>, %118, %cst_72 [1] : vector<4x4xf32> to vector<4xf32>
      %120 = vector.shape_cast %119 : vector<4xf32> to vector<4x1xf32>
      %121 = arith.subf %110, %120 : vector<4x1xf32>
      %c0_73 = arith.constant 0 : index
      %c0_74 = arith.constant 0 : index
      %122 = vector.load %arg5[%c0_73, %c0_74] : memref<4x1xf32, #tpu.memory_space<vmem>>, vector<4x1xf32>
      tpu.vector_store %arg5[%c0_73, %c0_74], %121 {strides = array<i32>} : memref<4x1xf32, #tpu.memory_space<vmem>>, vector<4x1xf32>,
    } else {
    }
    return
  }
  func.func @transform_0(%arg0: i32, %arg1: i32) -> (i32, i32, i32) {
    %c0_i32 = arith.constant 0 : i32
    %c0_i32_0 = arith.constant 0 : i32
    %c0_i32_1 = arith.constant 0 : i32
    return %c0_i32, %arg1, %c0_i32_0 : i32, i32, i32
  }
  func.func @transform_1(%arg0: i32, %arg1: i32) -> (i32, i32, i32) {
    %c0_i32 = arith.constant 0 : i32
    %c0_i32_0 = arith.constant 0 : i32
    return %arg0, %arg1, %c0_i32 : i32, i32, i32
  }
  func.func @transform_2(%arg0: i32, %arg1: i32) -> i32 {
    %c0_i32 = arith.constant 0 : i32
    %c0_i32_0 = arith.constant 0 : i32
    return %c0_i32 : i32
  }
  func.func @transform_3(%arg0: i32, %arg1: i32) -> (i32, i32) {
    %c0_i32 = arith.constant 0 : i32
    %c0_i32_0 = arith.constant 0 : i32
    return %arg0, %c0_i32 : i32, i32
  }
}

</mosaic_0001>

<llo_original>
// kernel: tpu_custom_call.1
$region0: #{tpu_custom_call.1}
  #allocation0 [shape = 'u32[]', space=smem, size = 0x4, offset = 0x4, fixed_abs, tag = 'smem constant byte address 0x4 - core index']
  #allocation1 [shape = 'u32[144,128]{1,0:T(1,128)}', space=vmem, size = 0x12000, scoped, tag = 'internal scratch']
  #allocation2 [shape = 'f32[4,4]{1,0:T(4,128)}', space=vmem, size = 0x800, scoped, tag = 'scratch operand']
  #allocation3 [shape = 'bf16[4,8,32]{2,1,0:T(8,128)(2,1)}', space=vmem, size = 0x2000, scoped, tag = 'scratch operand']
  #allocation4 [shape = 'bf16[4,8,32]{2,1,0:T(8,128)(2,1)}', space=vmem, size = 0x2000, scoped, tag = 'scratch operand']
  #allocation5 [shape = 'f32[1]{0:T(128)S(6)}', space=smem, size = 0x200, scoped, tag = 'scoped memory for tpu_custom_call.1']
  %s0 = inlined_call_operand.hbm [shape: f32[4,8,32], index: 0, kind: input, shape index: {}]
  %s1 = inlined_call_operand.hbm [shape: f32[4,8,32], index: 1, kind: input, shape index: {}]
  %s2 = inlined_call_operand.<no memory space> [shape: f32[1], index: 2, kind: input, shape index: {}]
  %s3 = inlined_call_operand.vmem [shape: f32[4,1], index: 3, kind: output, shape index: {}]
  %s4 = sld [smem:[#allocation0]]
  $region38: #{tpu_custom_call.1} parent=0
    _
  %s6 = ssub.s32 1, %s4
  %s7 = scalar_select 0, %s6, %s4
  %8 = sst [smem:[#allocation5]] %s2
  $region1: #{tpu_custom_call.1} parent=0
    #allocation6 [shape = 'u8[16384]{0}', space=vmem, size = 0x4000, scoped, tag = 'input window, operand 0, single buffered']
    #allocation7 [shape = 's32[1]{0}', space=sflag, size = 0x4, scoped, tag = 'scoped memory for tpu_custom_call.1']
    #allocation8 [shape = 'u8[16384]{0}', space=vmem, size = 0x4000, scoped, tag = 'input window, operand 1, single buffered']
    #allocation9 [shape = 's32[1]{0}', space=sflag, size = 0x4, scoped, tag = 'scoped memory for tpu_custom_call.1']
    %9 = vsyncpa [#allocation7], 0
    %10 = vsyncpa [#allocation9], 0
    // Predicated region
    $region2: #{tpu_custom_call.1} parent=1 // pred_check
      _
    $region3: #{tpu_custom_call.1} parent=1 // pred_check_branch
      %12 = sbr.rel (0) target = $region5
    $region4: #{tpu_custom_call.1} parent=1 // pred_region
      %s14 = ssub.s32 512, 512
      %15 = vsyncadd [#allocation7], %s14
      %s16 = sshll.u32 [#allocation6], 4
      %s17 = int_to_ptr.vmem [resolvable:$true] %s16
      %22 = dma.hbm_to_vmem [thread:$0]  %s0, 512, %s17, [#allocation7], 128, 128, 8
    $region5: #{tpu_custom_call.1} parent=1 // pred_fallthru
      _
    // Predicated region
    $region6: #{tpu_custom_call.1} parent=1 // pred_check
      _
    $region7: #{tpu_custom_call.1} parent=1 // pred_check_branch
      %24 = sbr.rel (0) target = $region9
    $region8: #{tpu_custom_call.1} parent=1 // pred_region
      %s26 = ssub.s32 512, 512
      %27 = vsyncadd [#allocation9], %s26
      %s28 = sshll.u32 [#allocation8], 4
      %s29 = int_to_ptr.vmem [resolvable:$true] %s28
      %34 = dma.hbm_to_vmem [thread:$0]  %s1, 512, %s29, [#allocation9], 128, 128, 8
    $region9: #{tpu_custom_call.1} parent=1 // pred_fallthru
      _
    // Predicated region
    $region10: #{tpu_custom_call.1} parent=1 // pred_check
      _
    $region11: #{tpu_custom_call.1} parent=1 // pred_check_branch
      %36 = sbr.rel (0) target = $region13
    $region12: #{tpu_custom_call.1} parent=1 // pred_region
      _
    $region13: #{tpu_custom_call.1} parent=1 // pred_fallthru
      _
    // Predicated region
    $region14: #{tpu_custom_call.1} parent=1 // pred_check
      _
    $region15: #{tpu_custom_call.1} parent=1 // pred_check_branch
      %38 = sbr.rel (0) target = $region17
    $region16: #{tpu_custom_call.1} parent=1 // pred_region
      %39 = dma.done [#allocation7], 512
    $region17: #{tpu_custom_call.1} parent=1 // pred_fallthru
      _
    // Predicated region
    $region18: #{tpu_custom_call.1} parent=1 // pred_check
      _
    $region19: #{tpu_custom_call.1} parent=1 // pred_check_branch
      %41 = sbr.rel (0) target = $region21
    $region20: #{tpu_custom_call.1} parent=1 // pred_region
      %42 = dma.done [#allocation9], 512
    $region21: #{tpu_custom_call.1} parent=1 // pred_fallthru
      _
    %p44 = scmp.eq.s32.totalorder 0, 0
    // Predicated region
    $region22: #{tpu_custom_call.1} parent=1 // pred_check
      %p45 = pneg %p44
    $region23: #{tpu_custom_call.1} parent=1 // pred_check_branch
      %47 = sbr.rel (%p45) target = $region25
    $region24: #{tpu_custom_call.1} parent=1 // pred_region
      %vm48 = vcmask 27648
      %49 = vst.msk [vmem:[#allocation2] sm:$0xf] %vm48, 0.0
    $region25: #{tpu_custom_call.1} parent=1 // pred_fallthru
      _
    %v50 = vld [vmem:[#allocation6] sm:$0xff]
    %v51 = vld [vmem:[#allocation6 + $0x8] sm:$0xff]
    %v52 = vld [vmem:[#allocation6 + $0x10] sm:$0xff]
    %v53 = vld [vmem:[#allocation6 + $0x18] sm:$0xff]
    %v54 = vld [vmem:[#allocation8] sm:$0xff]
    %v55 = vld [vmem:[#allocation8 + $0x8] sm:$0xff]
    %v56 = vld [vmem:[#allocation8 + $0x10] sm:$0xff]
    %v57 = vld [vmem:[#allocation8 + $0x18] sm:$0xff]
    %v58 = vmul.f32 %v50, %v50
    %v59 = vmul.f32 %v51, %v51
    %v60 = vmul.f32 %v52, %v52
    %v61 = vmul.f32 %v53, %v53
    %vm62 = vcmask 261120
    %v63 = vsel %vm62, %v58, 0.0
    %64 = vadd.xlane.f32.xlu0 %v63
    %v65 = vpop.xlane.xlu0 %64
    %v66 = vsel %vm62, %v59, 0.0
    %67 = vadd.xlane.f32.xlu0 %v66
    %v68 = vpop.xlane.xlu0 %67
    %v69 = vsel %vm62, %v60, 0.0
    %70 = vadd.xlane.f32.xlu0 %v69
    %v71 = vpop.xlane.xlu0 %70
    %v72 = vsel %vm62, %v61, 0.0
    %73 = vadd.xlane.f32.xlu0 %v72
    %v74 = vpop.xlane.xlu0 %73
    %v75 = vmul.f32 %v54, %v54
    %v76 = vmul.f32 %v55, %v55
    %v77 = vmul.f32 %v56, %v56
    %v78 = vmul.f32 %v57, %v57
    %v79 = vsel %vm62, %v75, 0.0
    %80 = vadd.xlane.f32.xlu0 %v79
    %v81 = vpop.xlane.xlu0 %80
    %v82 = vsel %vm62, %v76, 0.0
    %83 = vadd.xlane.f32.xlu0 %v82
    %v84 = vpop.xlane.xlu0 %83
    %v85 = vsel %vm62, %v77, 0.0
    %86 = vadd.xlane.f32.xlu0 %v85
    %v87 = vpop.xlane.xlu0 %86
    %v88 = vsel %vm62, %v78, 0.0
    %89 = vadd.xlane.f32.xlu0 %v88
    %v90 = vpop.xlane.xlu0 %89
    %v91 = vmax.f32 %v65, 1e-16
    %v92 = vmax.f32 %v68, 1e-16
    %v93 = vmax.f32 %v71, 1e-16
    %v94 = vmax.f32 %v74, 1e-16
    %v95 = vrsqrt.pop %v91
    %v96 = vrsqrt.pop %v92
    %v97 = vrsqrt.pop %v93
    %v98 = vrsqrt.pop %v94
    %v99 = vmul.f32 %v50, %v95
    %v100 = vmul.f32 %v51, %v96
    %v101 = vmul.f32 %v52, %v97
    %v102 = vmul.f32 %v53, %v98
    %v103 = vpack.c.bf16 %v99, %v99
    %v104 = vpack.c.bf16 %v100, %v100
    %v105 = vpack.c.bf16 %v101, %v101
    %v106 = vpack.c.bf16 %v102, %v102
    %vm107 = vcmask 257024
    %108 = vst.msk [vmem:[#allocation3] sm:$0xf] %vm107, %v103
    %109 = vst.msk [vmem:[#allocation3 + $0x4] sm:$0xf] %vm107, %v104
    %110 = vst.msk [vmem:[#allocation3 + $0x8] sm:$0xf] %vm107, %v105
    %111 = vst.msk [vmem:[#allocation3 + $0xc] sm:$0xf] %vm107, %v106
    %v112 = vmax.f32 %v81, 1e-16
    %v113 = vmax.f32 %v84, 1e-16
    %v114 = vmax.f32 %v87, 1e-16
    %v115 = vmax.f32 %v90, 1e-16
    %v116 = vrsqrt.pop %v112
    %v117 = vrsqrt.pop %v113
    %v118 = vrsqrt.pop %v114
    %v119 = vrsqrt.pop %v115
    %v120 = vmul.f32 %v54, %v116
    %v121 = vmul.f32 %v55, %v117
    %v122 = vmul.f32 %v56, %v118
    %v123 = vmul.f32 %v57, %v119
    %v124 = vpack.c.bf16 %v120, %v120
    %v125 = vpack.c.bf16 %v121, %v121
    %v126 = vpack.c.bf16 %v122, %v122
    %v127 = vpack.c.bf16 %v123, %v123
    %128 = vst.msk [vmem:[#allocation4] sm:$0xf] %vm107, %v124
    %129 = vst.msk [vmem:[#allocation4 + $0x4] sm:$0xf] %vm107, %v125
    %130 = vst.msk [vmem:[#allocation4 + $0x8] sm:$0xf] %vm107, %v126
    %131 = vst.msk [vmem:[#allocation4 + $0xc] sm:$0xf] %vm107, %v127
    %v132 = vld [vmem:[#allocation4] sm:$0x1]
    %v133 = vld [vmem:[#allocation4 + $0x4] sm:$0x1]
    %v134 = vld [vmem:[#allocation4 + $0x8] sm:$0x1]
    %v135 = vld [vmem:[#allocation4 + $0xc] sm:$0x1]
    %v136 = vld [vmem:[#allocation3] sm:$0x1]
    %v137 = vld [vmem:[#allocation3 + $0x4] sm:$0x1]
    %v138 = vld [vmem:[#allocation3 + $0x8] sm:$0x1]
    %v139 = vld [vmem:[#allocation3 + $0xc] sm:$0x1]
    %v144 = vunpack.c.l.b16 %v132
    %v145 = vunpack.c.l.b16 %v133
    %v146 = vunpack.c.l.b16 %v134
    %v147 = vunpack.c.l.b16 %v135
    %v148 = vpack.c.b16 %v144, %v144
    %v149 = vpack.c.b16 %v145, %v145
    %v150 = vpack.c.b16 %v146, %v146
    %v151 = vpack.c.b16 %v147, %v147
    %v152 = vunpack.c.l.b16 %v148
    %v153 = vunpack.c.l.b16 %v149
    %v154 = vunpack.c.l.b16 %v150
    %v155 = vunpack.c.l.b16 %v151
    %v156 = vrot.slane %v152, 1
    %vm157 = vcmask 1041409
    %v158 = vsel %vm157, %v153, %v156
    %v159 = vrot.slane %v154, 7
    %vm160 = vcmask 1042434
    %v161 = vsel %vm160, %v159, %v158
    %v162 = vrot.slane %v155, 6
    %vm163 = vcmask 1043459
    %v164 = vsel %vm163, %v162, %v161
    %v165 = vpack.c.b16 %v164, %v164
    %v170 = vunpack.c.l.b16 %v136
    %v171 = vunpack.c.l.b16 %v137
    %v172 = vunpack.c.l.b16 %v138
    %v173 = vunpack.c.l.b16 %v139
    %v174 = vpack.c.b16 %v170, %v170
    %v175 = vpack.c.b16 %v171, %v171
    %v176 = vpack.c.b16 %v172, %v172
    %v177 = vpack.c.b16 %v173, %v173
    %v178 = vunpack.c.l.b16 %v174
    %v179 = vunpack.c.l.b16 %v175
    %v180 = vunpack.c.l.b16 %v176
    %v181 = vunpack.c.l.b16 %v177
    %v182 = vrot.slane %v178, 1
    %v183 = vsel %vm157, %v179, %v182
    %v184 = vrot.slane %v180, 7
    %v185 = vsel %vm160, %v184, %v183
    %v186 = vrot.slane %v181, 6
    %v187 = vsel %vm163, %v186, %v185
    %v188 = vpack.c.b16 %v187, %v187
    %v190 = vsel %vm62, %v165, 0
    %v193 = vsel %vm62, %v188, 0
    %195 = vmatprep.subr.bf16.mxu0 0
    %196 = vmatpush1.bf16.xpose.msra.mxu0 %v193
    %197 = vmatprep.subr.bf16.mxu0 0
    %198 = vmatpush1.bf16.xpose.msra.mxu0 0
    %199 = vmatprep.subr.bf16.mxu0 0
    %200 = vmatpush1.bf16.xpose.msra.mxu0 0
    %201 = vmatprep.subr.bf16.mxu0 0
    %202 = vmatpush1.bf16.xpose.msra.mxu0 0
    %203 = vmatprep.subr.bf16.mxu0 0
    %204 = vmatpush1.bf16.xpose.msra.mxu0 0
    %205 = vmatprep.subr.bf16.mxu0 0
    %206 = vmatpush1.bf16.xpose.msra.mxu0 0
    %207 = vmatprep.subr.bf16.mxu0 0
    %208 = vmatpush1.bf16.xpose.msra.mxu0 0
    %209 = vmatprep.subr.bf16.mxu0 0
    %210 = vmatpush1.bf16.xpose.msra.mxu0 0
    %211 = vmatprep.subr.bf16.mxu0 0
    %212 = vmatpush1.bf16.xpose.msra.mxu0 0
    %213 = vmatprep.subr.bf16.mxu0 0
    %214 = vmatpush1.bf16.xpose.msra.mxu0 0
    %215 = vmatprep.subr.bf16.mxu0 0
    %216 = vmatpush1.bf16.xpose.msra.mxu0 0
    %217 = vmatprep.subr.bf16.mxu0 0
    %218 = vmatpush1.bf16.xpose.msra.mxu0 0
    %219 = vmatprep.subr.bf16.mxu0 0
    %220 = vmatpush1.bf16.xpose.msra.mxu0 0
    %221 = vmatprep.subr.bf16.mxu0 0
    %222 = vmatpush1.bf16.xpose.msra.mxu0 0
    %223 = vmatprep.subr.bf16.mxu0 0
    %224 = vmatpush1.bf16.xpose.msra.mxu0 0
    %225 = vmatprep.subr.bf16.mxu0 0
    %226 = vmatpush1.bf16.xpose.msra.mxu0 0
    %227 = vmatprep.mubr.bf16.mxu0 0
    %228 = vmatmul.mubr.bf16.gmra.mrb[0].mxu0 %v190
    %v229 = vpop.f32.mrb[0].mxu0
    %v230 = vadd.f32 0.0, %v229
    %v231 = vpop.f32.mrb[0].mxu0
    %v232 = vpop.f32.mrb[0].mxu0
    %v233 = vpop.f32.mrb[0].mxu0
    %234 = vdwg.mxu0
    %v235 = vrot.slane %v153, 7
    %v236 = vsel %vm157, %v235, %v152
    %v237 = vrot.slane %v154, 6
    %v238 = vsel %vm160, %v237, %v236
    %v239 = vrot.slane %v155, 5
    %v240 = vsel %vm163, %v239, %v238
    %v241 = vpack.c.b16 %v240, %v240
    %v242 = vrot.slane %v179, 7
    %v243 = vsel %vm157, %v242, %v178
    %v244 = vrot.slane %v180, 6
    %v245 = vsel %vm160, %v244, %v243
    %v246 = vrot.slane %v181, 5
    %v247 = vsel %vm163, %v246, %v245
    %v248 = vpack.c.b16 %v247, %v247
    %v250 = vsel %vm62, %v241, 0
    %v253 = vsel %vm62, %v248, 0
    %255 = vmatprep.subr.bf16.mxu0 0
    %256 = vmatpush1.bf16.xpose.msra.mxu0 %v253
    %257 = vmatprep.subr.bf16.mxu0 0
    %258 = vmatpush1.bf16.xpose.msra.mxu0 0
    %259 = vmatprep.subr.bf16.mxu0 0
    %260 = vmatpush1.bf16.xpose.msra.mxu0 0
    %261 = vmatprep.subr.bf16.mxu0 0
    %262 = vmatpush1.bf16.xpose.msra.mxu0 0
    %263 = vmatprep.subr.bf16.mxu0 0
    %264 = vmatpush1.bf16.xpose.msra.mxu0 0
    %265 = vmatprep.subr.bf16.mxu0 0
    %266 = vmatpush1.bf16.xpose.msra.mxu0 0
    %267 = vmatprep.subr.bf16.mxu0 0
    %268 = vmatpush1.bf16.xpose.msra.mxu0 0
    %269 = vmatprep.subr.bf16.mxu0 0
    %270 = vmatpush1.bf16.xpose.msra.mxu0 0
    %271 = vmatprep.subr.bf16.mxu0 0
    %272 = vmatpush1.bf16.xpose.msra.mxu0 0
    %273 = vmatprep.subr.bf16.mxu0 0
    %274 = vmatpush1.bf16.xpose.msra.mxu0 0
    %275 = vmatprep.subr.bf16.mxu0 0
    %276 = vmatpush1.bf16.xpose.msra.mxu0 0
    %277 = vmatprep.subr.bf16.mxu0 0
    %278 = vmatpush1.bf16.xpose.msra.mxu0 0
    %279 = vmatprep.subr.bf16.mxu0 0
    %280 = vmatpush1.bf16.xpose.msra.mxu0 0
    %281 = vmatprep.subr.bf16.mxu0 0
    %282 = vmatpush1.bf16.xpose.msra.mxu0 0
    %283 = vmatprep.subr.bf16.mxu0 0
    %284 = vmatpush1.bf16.xpose.msra.mxu0 0
    %285 = vmatprep.subr.bf16.mxu0 0
    %286 = vmatpush1.bf16.xpose.msra.mxu0 0
    %287 = vmatprep.mubr.bf16.mxu0 0
    %288 = vmatmul.mubr.bf16.gmra.mrb[0].mxu0 %v250
    %v289 = vpop.f32.mrb[0].mxu0
    %v290 = vadd.f32 %v230, %v289
    %v291 = vpop.f32.mrb[0].mxu0
    %v292 = vpop.f32.mrb[0].mxu0
    %v293 = vpop.f32.mrb[0].mxu0
    %294 = vdwg.mxu0
    %v295 = vld [vmem:[#allocation4] sm:$0x2]
    %v296 = vld [vmem:[#allocation4 + $0x4] sm:$0x2]
    %v297 = vld [vmem:[#allocation4 + $0x8] sm:$0x2]
    %v298 = vld [vmem:[#allocation4 + $0xc] sm:$0x2]
    %v299 = vld [vmem:[#allocation3] sm:$0x2]
    %v300 = vld [vmem:[#allocation3 + $0x4] sm:$0x2]
    %v301 = vld [vmem:[#allocation3 + $0x8] sm:$0x2]
    %v302 = vld [vmem:[#allocation3 + $0xc] sm:$0x2]
    %v307 = vunpack.c.l.b16 %v295
    %v308 = vunpack.c.l.b16 %v296
    %v309 = vunpack.c.l.b16 %v297
    %v310 = vunpack.c.l.b16 %v298
    %v311 = vpack.c.b16 %v307, %v307
    %v312 = vpack.c.b16 %v308, %v308
    %v313 = vpack.c.b16 %v309, %v309
    %v314 = vpack.c.b16 %v310, %v310
    %v315 = vunpack.c.l.b16 %v311
    %v316 = vunpack.c.l.b16 %v312
    %v317 = vunpack.c.l.b16 %v313
    %v318 = vunpack.c.l.b16 %v314
    %v319 = vrot.slane %v315, 2
    %v320 = vrot.slane %v316, 1
    %v321 = vsel %vm157, %v320, %v319
    %v322 = vsel %vm160, %v317, %v321
    %v323 = vrot.slane %v318, 7
    %v324 = vsel %vm163, %v323, %v322
    %v325 = vpack.c.b16 %v324, %v324
    %v330 = vunpack.c.l.b16 %v299
    %v331 = vunpack.c.l.b16 %v300
    %v332 = vunpack.c.l.b16 %v301
    %v333 = vunpack.c.l.b16 %v302
    %v334 = vpack.c.b16 %v330, %v330
    %v335 = vpack.c.b16 %v331, %v331
    %v336 = vpack.c.b16 %v332, %v332
    %v337 = vpack.c.b16 %v333, %v333
    %v338 = vunpack.c.l.b16 %v334
    %v339 = vunpack.c.l.b16 %v335
    %v340 = vunpack.c.l.b16 %v336
    %v341 = vunpack.c.l.b16 %v337
    %v342 = vrot.slane %v338, 2
    %v343 = vrot.slane %v339, 1
    %v344 = vsel %vm157, %v343, %v342
    %v345 = vsel %vm160, %v340, %v344
    %v346 = vrot.slane %v341, 7
    %v347 = vsel %vm163, %v346, %v345
    %v348 = vpack.c.b16 %v347, %v347
    %v350 = vsel %vm62, %v325, 0
    %v353 = vsel %vm62, %v348, 0
    %355 = vmatprep.subr.bf16.mxu0 0
    %356 = vmatpush1.bf16.xpose.msra.mxu0 %v353
    %357 = vmatprep.subr.bf16.mxu0 0
    %358 = vmatpush1.bf16.xpose.msra.mxu0 0
    %359 = vmatprep.subr.bf16.mxu0 0
    %360 = vmatpush1.bf16.xpose.msra.mxu0 0
    %361 = vmatprep.subr.bf16.mxu0 0
    %362 = vmatpush1.bf16.xpose.msra.mxu0 0
    %363 = vmatprep.subr.bf16.mxu0 0
    %364 = vmatpush1.bf16.xpose.msra.mxu0 0
    %365 = vmatprep.subr.bf16.mxu0 0
    %366 = vmatpush1.bf16.xpose.msra.mxu0 0
    %367 = vmatprep.subr.bf16.mxu0 0
    %368 = vmatpush1.bf16.xpose.msra.mxu0 0
    %369 = vmatprep.subr.bf16.mxu0 0
    %370 = vmatpush1.bf16.xpose.msra.mxu0 0
    %371 = vmatprep.subr.bf16.mxu0 0
    %372 = vmatpush1.bf16.xpose.msra.mxu0 0
    %373 = vmatprep.subr.bf16.mxu0 0
    %374 = vmatpush1.bf16.xpose.msra.mxu0 0
    %375 = vmatprep.subr.bf16.mxu0 0
    %376 = vmatpush1.bf16.xpose.msra.mxu0 0
    %377 = vmatprep.subr.bf16.mxu0 0
    %378 = vmatpush1.bf16.xpose.msra.mxu0 0
    %379 = vmatprep.subr.bf16.mxu0 0
    %380 = vmatpush1.bf16.xpose.msra.mxu0 0
    %381 = vmatprep.subr.bf16.mxu0 0
    %382 = vmatpush1.bf16.xpose.msra.mxu0 0
    %383 = vmatprep.subr.bf16.mxu0 0
    %384 = vmatpush1.bf16.xpose.msra.mxu0 0
    %385 = vmatprep.subr.bf16.mxu0 0
    %386 = vmatpush1.bf16.xpose.msra.mxu0 0
    %387 = vmatprep.mubr.bf16.mxu0 0
    %388 = vmatmul.mubr.bf16.gmra.mrb[0].mxu0 %v350
    %v389 = vpop.f32.mrb[0].mxu0
    %v390 = vadd.f32 0.0, %v389
    %v391 = vpop.f32.mrb[0].mxu0
    %v392 = vpop.f32.mrb[0].mxu0
    %v393 = vpop.f32.mrb[0].mxu0
    %394 = vdwg.mxu0
    %v395 = vadd.f32 %v290, %v390
    %v396 = vrot.slane %v315, 3
    %v397 = vrot.slane %v316, 2
    %v398 = vsel %vm157, %v397, %v396
    %v399 = vrot.slane %v317, 1
    %v400 = vsel %vm160, %v399, %v398
    %v401 = vsel %vm163, %v318, %v400
    %v402 = vpack.c.b16 %v401, %v401
    %v403 = vrot.slane %v338, 3
    %v404 = vrot.slane %v339, 2
    %v405 = vsel %vm157, %v404, %v403
    %v406 = vrot.slane %v340, 1
    %v407 = vsel %vm160, %v406, %v405
    %v408 = vsel %vm163, %v341, %v407
    %v409 = vpack.c.b16 %v408, %v408
    %v411 = vsel %vm62, %v402, 0
    %v414 = vsel %vm62, %v409, 0
    %416 = vmatprep.subr.bf16.mxu0 0
    %417 = vmatpush1.bf16.xpose.msra.mxu0 %v414
    %418 = vmatprep.subr.bf16.mxu0 0
    %419 = vmatpush1.bf16.xpose.msra.mxu0 0
    %420 = vmatprep.subr.bf16.mxu0 0
    %421 = vmatpush1.bf16.xpose.msra.mxu0 0
    %422 = vmatprep.subr.bf16.mxu0 0
    %423 = vmatpush1.bf16.xpose.msra.mxu0 0
    %424 = vmatprep.subr.bf16.mxu0 0
    %425 = vmatpush1.bf16.xpose.msra.mxu0 0
    %426 = vmatprep.subr.bf16.mxu0 0
    %427 = vmatpush1.bf16.xpose.msra.mxu0 0
    %428 = vmatprep.subr.bf16.mxu0 0
    %429 = vmatpush1.bf16.xpose.msra.mxu0 0
    %430 = vmatprep.subr.bf16.mxu0 0
    %431 = vmatpush1.bf16.xpose.msra.mxu0 0
    %432 = vmatprep.subr.bf16.mxu0 0
    %433 = vmatpush1.bf16.xpose.msra.mxu0 0
    %434 = vmatprep.subr.bf16.mxu0 0
    %435 = vmatpush1.bf16.xpose.msra.mxu0 0
    %436 = vmatprep.subr.bf16.mxu0 0
    %437 = vmatpush1.bf16.xpose.msra.mxu0 0
    %438 = vmatprep.subr.bf16.mxu0 0
    %439 = vmatpush1.bf16.xpose.msra.mxu0 0
    %440 = vmatprep.subr.bf16.mxu0 0
    %441 = vmatpush1.bf16.xpose.msra.mxu0 0
    %442 = vmatprep.subr.bf16.mxu0 0
    %443 = vmatpush1.bf16.xpose.msra.mxu0 0
    %444 = vmatprep.subr.bf16.mxu0 0
    %445 = vmatpush1.bf16.xpose.msra.mxu0 0
    %446 = vmatprep.subr.bf16.mxu0 0
    %447 = vmatpush1.bf16.xpose.msra.mxu0 0
    %448 = vmatprep.mubr.bf16.mxu0 0
    %449 = vmatmul.mubr.bf16.gmra.mrb[0].mxu0 %v411
    %v450 = vpop.f32.mrb[0].mxu0
    %v451 = vadd.f32 0.0, %v450
    %v452 = vpop.f32.mrb[0].mxu0
    %v453 = vpop.f32.mrb[0].mxu0
    %v454 = vpop.f32.mrb[0].mxu0
    %455 = vdwg.mxu0
    %v456 = vadd.f32 %v395, %v451
    %v457 = vld [vmem:[#allocation4] sm:$0x4]
    %v458 = vld [vmem:[#allocation4 + $0x4] sm:$0x4]
    %v459 = vld [vmem:[#allocation4 + $0x8] sm:$0x4]
    %v460 = vld [vmem:[#allocation4 + $0xc] sm:$0x4]
    %v461 = vld [vmem:[#allocation3] sm:$0x4]
    %v462 = vld [vmem:[#allocation3 + $0x4] sm:$0x4]
    %v463 = vld [vmem:[#allocation3 + $0x8] sm:$0x4]
    %v464 = vld [vmem:[#allocation3 + $0xc] sm:$0x4]
    %v469 = vunpack.c.l.b16 %v457
    %v470 = vunpack.c.l.b16 %v458
    %v471 = vunpack.c.l.b16 %v459
    %v472 = vunpack.c.l.b16 %v460
    %v473 = vpack.c.b16 %v469, %v469
    %v474 = vpack.c.b16 %v470, %v470
    %v475 = vpack.c.b16 %v471, %v471
    %v476 = vpack.c.b16 %v472, %v472
    %v477 = vunpack.c.l.b16 %v473
    %v478 = vunpack.c.l.b16 %v474
    %v479 = vunpack.c.l.b16 %v475
    %v480 = vunpack.c.l.b16 %v476
    %v481 = vrot.slane %v477, 4
    %v482 = vrot.slane %v478, 3
    %v483 = vsel %vm157, %v482, %v481
    %v484 = vrot.slane %v479, 2
    %v485 = vsel %vm160, %v484, %v483
    %v486 = vrot.slane %v480, 1
    %v487 = vsel %vm163, %v486, %v485
    %v488 = vpack.c.b16 %v487, %v487
    %v493 = vunpack.c.l.b16 %v461
    %v494 = vunpack.c.l.b16 %v462
    %v495 = vunpack.c.l.b16 %v463
    %v496 = vunpack.c.l.b16 %v464
    %v497 = vpack.c.b16 %v493, %v493
    %v498 = vpack.c.b16 %v494, %v494
    %v499 = vpack.c.b16 %v495, %v495
    %v500 = vpack.c.b16 %v496, %v496
    %v501 = vunpack.c.l.b16 %v497
    %v502 = vunpack.c.l.b16 %v498
    %v503 = vunpack.c.l.b16 %v499
    %v504 = vunpack.c.l.b16 %v500
    %v505 = vrot.slane %v501, 4
    %v506 = vrot.slane %v502, 3
    %v507 = vsel %vm157, %v506, %v505
    %v508 = vrot.slane %v503, 2
    %v509 = vsel %vm160, %v508, %v507
    %v510 = vrot.slane %v504, 1
    %v511 = vsel %vm163, %v510, %v509
    %v512 = vpack.c.b16 %v511, %v511
    %v514 = vsel %vm62, %v488, 0
    %v517 = vsel %vm62, %v512, 0
    %519 = vmatprep.subr.bf16.mxu0 0
    %520 = vmatpush1.bf16.xpose.msra.mxu0 %v517
    %521 = vmatprep.subr.bf16.mxu0 0
    %522 = vmatpush1.bf16.xpose.msra.mxu0 0
    %523 = vmatprep.subr.bf16.mxu0 0
    %524 = vmatpush1.bf16.xpose.msra.mxu0 0
    %525 = vmatprep.subr.bf16.mxu0 0
    %526 = vmatpush1.bf16.xpose.msra.mxu0 0
    %527 = vmatprep.subr.bf16.mxu0 0
    %528 = vmatpush1.bf16.xpose.msra.mxu0 0
    %529 = vmatprep.subr.bf16.mxu0 0
    %530 = vmatpush1.bf16.xpose.msra.mxu0 0
    %531 = vmatprep.subr.bf16.mxu0 0
    %532 = vmatpush1.bf16.xpose.msra.mxu0 0
    %533 = vmatprep.subr.bf16.mxu0 0
    %534 = vmatpush1.bf16.xpose.msra.mxu0 0
    %535 = vmatprep.subr.bf16.mxu0 0
    %536 = vmatpush1.bf16.xpose.msra.mxu0 0
    %537 = vmatprep.subr.bf16.mxu0 0
    %538 = vmatpush1.bf16.xpose.msra.mxu0 0
    %539 = vmatprep.subr.bf16.mxu0 0
    %540 = vmatpush1.bf16.xpose.msra.mxu0 0
    %541 = vmatprep.subr.bf16.mxu0 0
    %542 = vmatpush1.bf16.xpose.msra.mxu0 0
    %543 = vmatprep.subr.bf16.mxu0 0
    %544 = vmatpush1.bf16.xpose.msra.mxu0 0
    %545 = vmatprep.subr.bf16.mxu0 0
    %546 = vmatpush1.bf16.xpose.msra.mxu0 0
    %547 = vmatprep.subr.bf16.mxu0 0
    %548 = vmatpush1.bf16.xpose.msra.mxu0 0
    %549 = vmatprep.subr.bf16.mxu0 0
    %550 = vmatpush1.bf16.xpose.msra.mxu0 0
    %551 = vmatprep.mubr.bf16.mxu0 0
    %552 = vmatmul.mubr.bf16.gmra.mrb[0].mxu0 %v514
    %v553 = vpop.f32.mrb[0].mxu0
    %v554 = vadd.f32 0.0, %v553
    %v555 = vpop.f32.mrb[0].mxu0
    %v556 = vpop.f32.mrb[0].mxu0
    %v557 = vpop.f32.mrb[0].mxu0
    %558 = vdwg.mxu0
    %v559 = vadd.f32 %v456, %v554
    %v560 = vrot.slane %v477, 5
    %v561 = vrot.slane %v478, 4
    %v562 = vsel %vm157, %v561, %v560
    %v563 = vrot.slane %v479, 3
    %v564 = vsel %vm160, %v563, %v562
    %v565 = vrot.slane %v480, 2
    %v566 = vsel %vm163, %v565, %v564
    %v567 = vpack.c.b16 %v566, %v566
    %v568 = vrot.slane %v501, 5
    %v569 = vrot.slane %v502, 4
    %v570 = vsel %vm157, %v569, %v568
    %v571 = vrot.slane %v503, 3
    %v572 = vsel %vm160, %v571, %v570
    %v573 = vrot.slane %v504, 2
    %v574 = vsel %vm163, %v573, %v572
    %v575 = vpack.c.b16 %v574, %v574
    %v577 = vsel %vm62, %v567, 0
    %v580 = vsel %vm62, %v575, 0
    %582 = vmatprep.subr.bf16.mxu0 0
    %583 = vmatpush1.bf16.xpose.msra.mxu0 %v580
    %584 = vmatprep.subr.bf16.mxu0 0
    %585 = vmatpush1.bf16.xpose.msra.mxu0 0
    %586 = vmatprep.subr.bf16.mxu0 0
    %587 = vmatpush1.bf16.xpose.msra.mxu0 0
    %588 = vmatprep.subr.bf16.mxu0 0
    %589 = vmatpush1.bf16.xpose.msra.mxu0 0
    %590 = vmatprep.subr.bf16.mxu0 0
    %591 = vmatpush1.bf16.xpose.msra.mxu0 0
    %592 = vmatprep.subr.bf16.mxu0 0
    %593 = vmatpush1.bf16.xpose.msra.mxu0 0
    %594 = vmatprep.subr.bf16.mxu0 0
    %595 = vmatpush1.bf16.xpose.msra.mxu0 0
    %596 = vmatprep.subr.bf16.mxu0 0
    %597 = vmatpush1.bf16.xpose.msra.mxu0 0
    %598 = vmatprep.subr.bf16.mxu0 0
    %599 = vmatpush1.bf16.xpose.msra.mxu0 0
    %600 = vmatprep.subr.bf16.mxu0 0
    %601 = vmatpush1.bf16.xpose.msra.mxu0 0
    %602 = vmatprep.subr.bf16.mxu0 0
    %603 = vmatpush1.bf16.xpose.msra.mxu0 0
    %604 = vmatprep.subr.bf16.mxu0 0
    %605 = vmatpush1.bf16.xpose.msra.mxu0 0
    %606 = vmatprep.subr.bf16.mxu0 0
    %607 = vmatpush1.bf16.xpose.msra.mxu0 0
    %608 = vmatprep.subr.bf16.mxu0 0
    %609 = vmatpush1.bf16.xpose.msra.mxu0 0
    %610 = vmatprep.subr.bf16.mxu0 0
    %611 = vmatpush1.bf16.xpose.msra.mxu0 0
    %612 = vmatprep.subr.bf16.mxu0 0
    %613 = vmatpush1.bf16.xpose.msra.mxu0 0
    %614 = vmatprep.mubr.bf16.mxu0 0
    %615 = vmatmul.mubr.bf16.gmra.mrb[0].mxu0 %v577
    %v616 = vpop.f32.mrb[0].mxu0
    %v617 = vadd.f32 0.0, %v616
    %v618 = vpop.f32.mrb[0].mxu0
    %v619 = vpop.f32.mrb[0].mxu0
    %v620 = vpop.f32.mrb[0].mxu0
    %621 = vdwg.mxu0
    %v622 = vadd.f32 %v559, %v617
    %v623 = vld [vmem:[#allocation4] sm:$0x8]
    %v624 = vld [vmem:[#allocation4 + $0x4] sm:$0x8]
    %v625 = vld [vmem:[#allocation4 + $0x8] sm:$0x8]
    %v626 = vld [vmem:[#allocation4 + $0xc] sm:$0x8]
    %v627 = vld [vmem:[#allocation3] sm:$0x8]
    %v628 = vld [vmem:[#allocation3 + $0x4] sm:$0x8]
    %v629 = vld [vmem:[#allocation3 + $0x8] sm:$0x8]
    %v630 = vld [vmem:[#allocation3 + $0xc] sm:$0x8]
    %v635 = vunpack.c.l.b16 %v623
    %v636 = vunpack.c.l.b16 %v624
    %v637 = vunpack.c.l.b16 %v625
    %v638 = vunpack.c.l.b16 %v626
    %v639 = vpack.c.b16 %v635, %v635
    %v640 = vpack.c.b16 %v636, %v636
    %v641 = vpack.c.b16 %v637, %v637
    %v642 = vpack.c.b16 %v638, %v638
    %v643 = vunpack.c.l.b16 %v639
    %v644 = vunpack.c.l.b16 %v640
    %v645 = vunpack.c.l.b16 %v641
    %v646 = vunpack.c.l.b16 %v642
    %v647 = vrot.slane %v643, 6
    %v648 = vrot.slane %v644, 5
    %v649 = vsel %vm157, %v648, %v647
    %v650 = vrot.slane %v645, 4
    %v651 = vsel %vm160, %v650, %v649
    %v652 = vrot.slane %v646, 3
    %v653 = vsel %vm163, %v652, %v651
    %v654 = vpack.c.b16 %v653, %v653
    %v659 = vunpack.c.l.b16 %v627
    %v660 = vunpack.c.l.b16 %v628
    %v661 = vunpack.c.l.b16 %v629
    %v662 = vunpack.c.l.b16 %v630
    %v663 = vpack.c.b16 %v659, %v659
    %v664 = vpack.c.b16 %v660, %v660
    %v665 = vpack.c.b16 %v661, %v661
    %v666 = vpack.c.b16 %v662, %v662
    %v667 = vunpack.c.l.b16 %v663
    %v668 = vunpack.c.l.b16 %v664
    %v669 = vunpack.c.l.b16 %v665
    %v670 = vunpack.c.l.b16 %v666
    %v671 = vrot.slane %v667, 6
    %v672 = vrot.slane %v668, 5
    %v673 = vsel %vm157, %v672, %v671
    %v674 = vrot.slane %v669, 4
    %v675 = vsel %vm160, %v674, %v673
    %v676 = vrot.slane %v670, 3
    %v677 = vsel %vm163, %v676, %v675
    %v678 = vpack.c.b16 %v677, %v677
    %v680 = vsel %vm62, %v654, 0
    %v683 = vsel %vm62, %v678, 0
    %685 = vmatprep.subr.bf16.mxu0 0
    %686 = vmatpush1.bf16.xpose.msra.mxu0 %v683
    %687 = vmatprep.subr.bf16.mxu0 0
    %688 = vmatpush1.bf16.xpose.msra.mxu0 0
    %689 = vmatprep.subr.bf16.mxu0 0
    %690 = vmatpush1.bf16.xpose.msra.mxu0 0
    %691 = vmatprep.subr.bf16.mxu0 0
    %692 = vmatpush1.bf16.xpose.msra.mxu0 0
    %693 = vmatprep.subr.bf16.mxu0 0
    %694 = vmatpush1.bf16.xpose.msra.mxu0 0
    %695 = vmatprep.subr.bf16.mxu0 0
    %696 = vmatpush1.bf16.xpose.msra.mxu0 0
    %697 = vmatprep.subr.bf16.mxu0 0
    %698 = vmatpush1.bf16.xpose.msra.mxu0 0
    %699 = vmatprep.subr.bf16.mxu0 0
    %700 = vmatpush1.bf16.xpose.msra.mxu0 0
    %701 = vmatprep.subr.bf16.mxu0 0
    %702 = vmatpush1.bf16.xpose.msra.mxu0 0
    %703 = vmatprep.subr.bf16.mxu0 0
    %704 = vmatpush1.bf16.xpose.msra.mxu0 0
    %705 = vmatprep.subr.bf16.mxu0 0
    %706 = vmatpush1.bf16.xpose.msra.mxu0 0
    %707 = vmatprep.subr.bf16.mxu0 0
    %708 = vmatpush1.bf16.xpose.msra.mxu0 0
    %709 = vmatprep.subr.bf16.mxu0 0
    %710 = vmatpush1.bf16.xpose.msra.mxu0 0
    %711 = vmatprep.subr.bf16.mxu0 0
    %712 = vmatpush1.bf16.xpose.msra.mxu0 0
    %713 = vmatprep.subr.bf16.mxu0 0
    %714 = vmatpush1.bf16.xpose.msra.mxu0 0
    %715 = vmatprep.subr.bf16.mxu0 0
    %716 = vmatpush1.bf16.xpose.msra.mxu0 0
    %717 = vmatprep.mubr.bf16.mxu0 0
    %718 = vmatmul.mubr.bf16.gmra.mrb[0].mxu0 %v680
    %v719 = vpop.f32.mrb[0].mxu0
    %v720 = vadd.f32 0.0, %v719
    %v721 = vpop.f32.mrb[0].mxu0
    %v722 = vpop.f32.mrb[0].mxu0
    %v723 = vpop.f32.mrb[0].mxu0
    %724 = vdwg.mxu0
    %v725 = vadd.f32 %v622, %v720
    %v726 = vrot.slane %v643, 7
    %v727 = vrot.slane %v644, 6
    %v728 = vsel %vm157, %v727, %v726
    %v729 = vrot.slane %v645, 5
    %v730 = vsel %vm160, %v729, %v728
    %v731 = vrot.slane %v646, 4
    %v732 = vsel %vm163, %v731, %v730
    %v733 = vpack.c.b16 %v732, %v732
    %v734 = vrot.slane %v667, 7
    %v735 = vrot.slane %v668, 6
    %v736 = vsel %vm157, %v735, %v734
    %v737 = vrot.slane %v669, 5
    %v738 = vsel %vm160, %v737, %v736
    %v739 = vrot.slane %v670, 4
    %v740 = vsel %vm163, %v739, %v738
    %v741 = vpack.c.b16 %v740, %v740
    %v743 = vsel %vm62, %v733, 0
    %v746 = vsel %vm62, %v741, 0
    %748 = vmatprep.subr.bf16.mxu0 0
    %749 = vmatpush1.bf16.xpose.msra.mxu0 %v746
    %750 = vmatprep.subr.bf16.mxu0 0
    %751 = vmatpush1.bf16.xpose.msra.mxu0 0
    %752 = vmatprep.subr.bf16.mxu0 0
    %753 = vmatpush1.bf16.xpose.msra.mxu0 0
    %754 = vmatprep.subr.bf16.mxu0 0
    %755 = vmatpush1.bf16.xpose.msra.mxu0 0
    %756 = vmatprep.subr.bf16.mxu0 0
    %757 = vmatpush1.bf16.xpose.msra.mxu0 0
    %758 = vmatprep.subr.bf16.mxu0 0
    %759 = vmatpush1.bf16.xpose.msra.mxu0 0
    %760 = vmatprep.subr.bf16.mxu0 0
    %761 = vmatpush1.bf16.xpose.msra.mxu0 0
    %762 = vmatprep.subr.bf16.mxu0 0
    %763 = vmatpush1.bf16.xpose.msra.mxu0 0
    %764 = vmatprep.subr.bf16.mxu0 0
    %765 = vmatpush1.bf16.xpose.msra.mxu0 0
    %766 = vmatprep.subr.bf16.mxu0 0
    %767 = vmatpush1.bf16.xpose.msra.mxu0 0
    %768 = vmatprep.subr.bf16.mxu0 0
    %769 = vmatpush1.bf16.xpose.msra.mxu0 0
    %770 = vmatprep.subr.bf16.mxu0 0
    %771 = vmatpush1.bf16.xpose.msra.mxu0 0
    %772 = vmatprep.subr.bf16.mxu0 0
    %773 = vmatpush1.bf16.xpose.msra.mxu0 0
    %774 = vmatprep.subr.bf16.mxu0 0
    %775 = vmatpush1.bf16.xpose.msra.mxu0 0
    %776 = vmatprep.subr.bf16.mxu0 0
    %777 = vmatpush1.bf16.xpose.msra.mxu0 0
    %778 = vmatprep.subr.bf16.mxu0 0
    %779 = vmatpush1.bf16.xpose.msra.mxu0 0
    %780 = vmatprep.mubr.bf16.mxu0 0
    %781 = vmatmul.mubr.bf16.gmra.mrb[0].mxu0 %v743
    %v782 = vpop.f32.mrb[0].mxu0
    %v783 = vadd.f32 0.0, %v782
    %v784 = vpop.f32.mrb[0].mxu0
    %v785 = vpop.f32.mrb[0].mxu0
    %v786 = vpop.f32.mrb[0].mxu0
    %787 = vdwg.mxu0
    %v788 = vadd.f32 %v725, %v783
    %v789 = vld [vmem:[#allocation2] sm:$0xf]
    %v790 = vadd.f32 %v789, %v788
    %vm791 = vcmask 27648
    %792 = vst.msk [vmem:[#allocation2] sm:$0xf] %vm791, %v790
    // Predicated region
    $region26: #{tpu_custom_call.1} parent=1 // pred_check
      %p793 = pneg %p44
    $region27: #{tpu_custom_call.1} parent=1 // pred_check_branch
      %795 = sbr.rel (%p793) target = $region29
    $region28: #{tpu_custom_call.1} parent=1 // pred_region
      %s796 = sld [smem:[#allocation5]]
      %s797 = smul.f32 %s796, 8.0
      %v798 = vstv %s797
      %v799 = vrcp.pop %v798
      %s800 = vtos %v799
      %v801 = vld [vmem:[#allocation2] sm:$0xf]
      %v802 = vstv %s800
      %v803 = vmul.f32 %v801, %v802
      %v804 = vsel %vm791, %v803, -inf
      %805 = vmax.xlane.f32.xlu0 %v804
      %v806 = vpop.xlane.xlu0 %805
      %v807 = vsub.f32 %v803, %v806
      %v808 = vmul.f32 %v807, 1.442695
      %v809 = vpow.pop %v808
      %v810 = vsel %vm791, %v809, 0.0
      %811 = vadd.xlane.f32.xlu0 %v810
      %v812 = vpop.xlane.xlu0 %811
      %v813 = vlog2.pop %v812
      %v814 = vmul.f32 %v813, 0.6931472
      %v815 = vadd.f32 %v814, %v806
      %v816 = vlaneseq
      %v817 = vshrl.u32 %v816, 7
      %s818 = smul.u32 0, 4
      %v819 = vstv %s818
      %v820 = vadd.s32 %v817, %v819
      %v821 = vlaneseq
      %v822 = vand.u32 %v821, 127
      %vm823 = vcmp.eq.s32.totalorder %v820, %v822
      %v824 = vsel %vm823, %v803, 0.0
      %v825 = vsel %vm791, %v824, 0.0
      %826 = vadd.xlane.f32.xlu0 %v825
      %v827 = vpop.xlane.xlu0 %826
      %v828 = vsub.f32 %v815, %v827
      %vm829 = vcmask 3072
      %830 = vst.msk [vmem:[%s3] sm:$0xf] %vm829, %v828
    $region29: #{tpu_custom_call.1} parent=1 // pred_fallthru
      _
    // Predicated region
    $region30: #{tpu_custom_call.1} parent=1 // pred_check
      _
    $region31: #{tpu_custom_call.1} parent=1 // pred_check_branch
      %832 = sbr.rel (0) target = $region33
    $region32: #{tpu_custom_call.1} parent=1 // pred_region
      _
    $region33: #{tpu_custom_call.1} parent=1 // pred_fallthru
      _
    // Predicated region
    $region34: #{tpu_custom_call.1} parent=1 // pred_check
      _
    $region35: #{tpu_custom_call.1} parent=1 // pred_check_branch
      %834 = sbr.rel (0) target = $region37
    $region36: #{tpu_custom_call.1} parent=1 // pred_region
      _
    $region37: #{tpu_custom_call.1} parent=1 // pred_fallthru
      _
    %835 = vsyncpa [#allocation7], 1
    %836 = vsyncpa [#allocation9], 1

</llo_original>
